<compile_context>
chip_gen: v7x
topology: tpu7x:2x2x1
jax: 0.10.0
libtpu: 0.0.40
codegen_flags: <defaults>
</compile_context>

<pallas_src>
import functools

import jax
import jax.numpy as jnp
from jax.experimental import pallas as pl
from jax.experimental.pallas import tpu as pltpu

SOFTMAX_MULT = 15.0
# Small-scale stand-in for the original 640-wide YOLO input.
TENSOR_DEFAULT_WIDTH = 64
PATCH = 4          # patch size used to build the synthetic anchor features
HEAD_OUT = 8       # synthetic head channels (cols 0..5 used; 8 = sublane tile)
LANE_BUDGET = 512  # max lanes (anchors * batch) processed per grid step


def _yolobox_kernel(feat_ref, w_ref, b_ref, out_ref, *,
                    scale_factor, bblk, n_anchors):
    """Fused: head matmul -> scores -> softmax -> weighted xywh -> xyxy.

    feat_ref: (1, F, bblk*N) bf16  anchor features, batch*anchors on lanes
    w_ref:    (C, F)         bf16  transposed head weights (grid-invariant)
    b_ref:    (C, 1)         f32   head bias, column vector
    out_ref:  (bblk, 4, 1)   f32   selected (softmax-weighted) xyxy boxes
    """
    w = w_ref[...]                      # (C, F) bf16
    b = b_ref[...]                      # (C, 1) f32
    feat = feat_ref[0]                  # (F, bblk*N) bf16

    # Synthetic detection head (stand-in for yolov5n output[0]):
    # one MXU matmul covering every batch element in this block,
    # lane-dense (C, bblk*N) result, f32 accumulation.
    yolo = jnp.dot(w, feat, preferred_element_type=jnp.float32) + b

    xywh_all = yolo[0:4, :]                                         # (4, L)
    # scores = obj * cls, pre-multiplied by the softmax temperature.
    scores_all = (yolo[4:5, :] * yolo[5:6, :]) * SOFTMAX_MULT       # (1, L)

    # Static unroll over the (small) per-step batch block; every slice below
    # is a 128-aligned lane slice of an already-resident vreg tile.
    for bi in range(bblk):
        lo = bi * n_anchors
        scores = scores_all[:, lo:lo + n_anchors]                   # (1, N)
        xywh = xywh_all[:, lo:lo + n_anchors]                       # (4, N)

        # softmax(scores) over anchors: single-vreg lane reduces.
        m = jnp.max(scores, axis=1, keepdims=True)                  # (1, 1)
        e = jnp.exp(scores - m)                                     # (1, N)
        denom = jnp.sum(e, axis=1, keepdims=True)                   # (1, 1)
        # Fused softmax normalization + scale_factor on the EUP recip path.
        inv = pl.reciprocal(denom, approx=True) * scale_factor      # (1, 1)

        # Weighted sums of xc, yc, w, h in one broadcast-multiply + lane reduce.
        s = jnp.sum(e * xywh, axis=1, keepdims=True)                # (4, 1)
        xy = s[0:2, :]                                              # (Sxc, Syc)
        wh = s[2:4, :] * 0.5                                        # (Sww, Shh)/2
        # xywh2xyxy folded into the reduced scalars: [x1, y1, x2, y2]^T
        box = jnp.concatenate([xy - wh, xy + wh], axis=0) * inv     # (4, 1)
        out_ref[bi] = box


def yolobox_select_boxes(feat_t, w_t, b_t, scale_factor):
    """feat_t: (B, F, N) bf16 -> selected boxes (B, 4) float32."""
    B, F, N = feat_t.shape
    C = w_t.shape[0]

    # Pack as many batch elements per grid step as fit in the lane budget
    # (fewer, denser steps amortize the ~0.35us per-step pipeline overhead
    # and feed the MXU one wide matmul instead of many tiny ones).
    bblk = max(1, min(B, LANE_BUDGET // N))
    while B % bblk != 0:
        bblk -= 1
    grid = B // bblk
    L = bblk * N

    # Host-side regroup: (B, F, N) -> (grid, F, bblk*N), batches concatenated
    # along the lane axis within each grid step.  Tiny, plain-JAX glue.
    feat_g = (feat_t.reshape(grid, bblk, F, N)
              .transpose(0, 2, 1, 3)
              .reshape(grid, F, L))

    kernel = functools.partial(
        _yolobox_kernel, scale_factor=float(scale_factor),
        bblk=bblk, n_anchors=N)

    out = pl.pallas_call(
        kernel,
        out_shape=jax.ShapeDtypeStruct((B, 4, 1), jnp.float32),
        grid_spec=pltpu.PrefetchScalarGridSpec(
            num_scalar_prefetch=0,
            grid=(grid,),
            in_specs=[
                pl.BlockSpec((1, F, L), lambda i: (i, 0, 0)),
                # w/b are grid-invariant constants (index_map always (0,0)).
                pl.BlockSpec((C, F), lambda i: (0, 0)),
                pl.BlockSpec((C, 1), lambda i: (0, 0)),
            ],
            out_specs=pl.BlockSpec((bblk, 4, 1), lambda i: (i, 0, 0)),
        ),
        compiler_params=pltpu.CompilerParams(
            dimension_semantics=("parallel",)),
    )(feat_g, w_t, b_t)
    return out[:, :, 0]                                             # (B, 4)


def preprocess_and_featurize(og_imgs):
    """Plain-JAX glue: /255, gray->RGB, bilinear resize, patchify.

    Returns (B, F, N) bf16 with anchors on the last (lane) axis.
    """
    B = og_imgs.shape[0]
    imgs = og_imgs.astype(jnp.float32) / 255.0
    imgs = jnp.repeat(imgs, 3, axis=1)                              # (B,3,H,W)
    rh, rw = TENSOR_DEFAULT_WIDTH // 2, TENSOR_DEFAULT_WIDTH
    # torch F.interpolate(mode='bilinear', align_corners=False) ~ jax bilinear
    resized = jax.image.resize(imgs, (B, 3, rh, rw), method="bilinear")
    ph, pw = rh // PATCH, rw // PATCH
    feat = resized.reshape(B, 3, ph, PATCH, pw, PATCH)
    # (B, 3, ph, P, pw, P) -> (B, F=3*P*P, N=ph*pw): features on sublanes,
    # anchors on lanes.  bf16 halves the HBM->VMEM DMA and feeds the MXU.
    feat_t = feat.transpose(0, 1, 3, 5, 2, 4).reshape(
        B, 3 * PATCH * PATCH, ph * pw)
    return feat_t.astype(jnp.bfloat16)


def yolobox_forward(og_imgs, w_t, b_t):
    # TODO(synk): real yolov5n backbone (torch.hub) replaced by synthetic linear head.
    feat_t = preprocess_and_featurize(og_imgs)
    scale_factor = og_imgs.shape[3] / TENSOR_DEFAULT_WIDTH
    selected = yolobox_select_boxes(feat_t, w_t, b_t, scale_factor)  # (B, 4)
    # TODO(synk): Camera.batch_xyz_from_boxes needs external calibration yaml; return boxes.
    return selected


def yolobox_forward_reference(og_imgs, w_t, b_t):
    """Pure-JAX reference of the same computation (un-folded, for validation)."""
    feat_t = preprocess_and_featurize(og_imgs)
    scale_factor = og_imgs.shape[3] / TENSOR_DEFAULT_WIDTH
    feat_nf = jnp.transpose(feat_t, (0, 2, 1))                      # (B, N, F) bf16
    yolo = jnp.einsum("bnf,cf->bnc", feat_nf, w_t,
                      preferred_element_type=jnp.float32)
    yolo = yolo + b_t[:, 0][None, None, :]                          # (B, N, C)
    xc, yc, wv, hv = yolo[..., 0], yolo[..., 1], yolo[..., 2], yolo[..., 3]
    boxes = jnp.stack(
        [xc - wv / 2, yc - hv / 2, xc + wv / 2, yc + hv / 2], axis=-1)  # (B,N,4)
    scores = yolo[..., 4] * yolo[..., 5]                            # (B, N)
    soft = jax.nn.softmax(scores * SOFTMAX_MULT, axis=1)            # (B, N)
    return jnp.einsum("bn,bnf->bf", soft, boxes) * scale_factor     # (B, 4)


if __name__ == "__main__":
    key = jax.random.PRNGKey(0)
    k_img, k_w, k_b = jax.random.split(key, 3)

    B, H, W = 2, 16, 32                       # grayscale NCHW input (B,1,H,W)
    og_imgs = jax.random.uniform(k_img, (B, 1, H, W), jnp.float32,
                                 minval=0.0, maxval=255.0)

    F = 3 * PATCH * PATCH                     # 48 anchor features
    w = jax.random.normal(k_w, (F, HEAD_OUT), jnp.float32) * 0.5
    b = jax.random.normal(k_b, (HEAD_OUT,), jnp.float32) * 0.1
    # Transposed, bf16 weights for the lane-dense kernel layout; bias as column.
    w_t = jnp.transpose(w, (1, 0)).astype(jnp.bfloat16)             # (C, F)
    b_t = b[:, None].astype(jnp.float32)                            # (C, 1)

    out = yolobox_forward(og_imgs, w_t, b_t)
    jax.block_until_ready(out)

    ref = yolobox_forward_reference(og_imgs, w_t, b_t)
    assert out.shape == (B, 4)
    # bf16 matmul inputs + approx reciprocal + folded box algebra -> small
    # reordering/approximation differences vs the un-folded f32 reference.
    assert jnp.allclose(out, ref, rtol=5e-3, atol=5e-3), (out, ref)

    print("KERNEL_OK")
</pallas_src>

<mosaic_0001>
module attributes {stable_mosaic.version = 11 : i64} {
  func.func @_yolobox_kernel(%arg0: i32, %arg1: memref<1x48x256xbf16, #tpu.memory_space<vmem>>, %arg2: memref<8x48xbf16, #tpu.memory_space<vmem>>, %arg3: memref<8x1xf32, #tpu.memory_space<vmem>>, %arg4: memref<2x4x1xf32, #tpu.memory_space<vmem>>) attributes {dimension_semantics = [#tpu.dimension_semantics<parallel>], iteration_bounds = array<i64: 1>, scalar_prefetch = 0 : i64, scratch_operands = 0 : i64, tpu.core_type = #tpu.core_type<tc>, window_params = [{transform_indices = @transform_0, window_bounds = array<i64: 1, 48, 256>}, {pipeline_mode = #tpu.pipeline_mode<synchronous>, transform_indices = @transform_1, window_bounds = array<i64: 8, 48>}, {pipeline_mode = #tpu.pipeline_mode<synchronous>, transform_indices = @transform_2, window_bounds = array<i64: 8, 1>}, {transform_indices = @transform_3, window_bounds = array<i64: 2, 4, 1>}]} {
    %c0 = arith.constant 0 : index
    %c0_0 = arith.constant 0 : index
    %0 = vector.load %arg2[%c0, %c0_0] : memref<8x48xbf16, #tpu.memory_space<vmem>>, vector<8x48xbf16>
    %c0_1 = arith.constant 0 : index
    %c0_2 = arith.constant 0 : index
    %1 = vector.load %arg3[%c0_1, %c0_2] : memref<8x1xf32, #tpu.memory_space<vmem>>, vector<8x1xf32>
    %c0_3 = arith.constant 0 : index
    %c0_4 = arith.constant 0 : index
    %c0_5 = arith.constant 0 : index
    %2 = vector.load %arg1[%c0_3, %c0_4, %c0_5] : memref<1x48x256xbf16, #tpu.memory_space<vmem>>, vector<1x48x256xbf16>
    %3 = vector.shape_cast %2 : vector<1x48x256xbf16> to vector<48x256xbf16>
    %cst = arith.constant dense<0.000000e+00> : vector<8x256xf32>
    %4 = tpu.matmul %0, %3, %cst {dimension_numbers = #tpu.dot_dimension_numbers<[1], [0], [0], [1], [0, 0, 1, 1], [], []>} : vector<8x48xbf16>, vector<48x256xbf16>, vector<8x256xf32> -> vector<8x256xf32>
    %5 = vector.broadcast %1 : vector<8x1xf32> to vector<8x256xf32>
    %6 = arith.addf %4, %5 : vector<8x256xf32>
    %7 = vector.extract_strided_slice %6 {offsets = [0, 0], sizes = [4, 256], strides = [1, 1]} : vector<8x256xf32> to vector<4x256xf32>
    %8 = vector.extract_strided_slice %6 {offsets = [4, 0], sizes = [1, 256], strides = [1, 1]} : vector<8x256xf32> to vector<1x256xf32>
    %9 = vector.extract_strided_slice %6 {offsets = [5, 0], sizes = [1, 256], strides = [1, 1]} : vector<8x256xf32> to vector<1x256xf32>
    %10 = arith.mulf %8, %9 : vector<1x256xf32>
    %cst_6 = arith.constant 1.500000e+01 : f32
    %11 = vector.broadcast %cst_6 : f32 to vector<1x256xf32>
    %12 = arith.mulf %10, %11 : vector<1x256xf32>
    %13 = vector.extract_strided_slice %12 {offsets = [0, 0], sizes = [1, 128], strides = [1, 1]} : vector<1x256xf32> to vector<1x128xf32>
    %14 = vector.extract_strided_slice %7 {offsets = [0, 0], sizes = [4, 128], strides = [1, 1]} : vector<4x256xf32> to vector<4x128xf32>
    %cst_7 = arith.constant dense<0xFF800000> : vector<1xf32>
    %15 = vector.multi_reduction <maximumf>, %13, %cst_7 [1] : vector<1x128xf32> to vector<1xf32>
    %16 = vector.shape_cast %15 : vector<1xf32> to vector<1x1xf32>
    %17 = vector.broadcast %16 : vector<1x1xf32> to vector<1x128xf32>
    %18 = arith.subf %13, %17 : vector<1x128xf32>
    %19 = math.exp %18 : vector<1x128xf32>
    %cst_8 = arith.constant dense<0.000000e+00> : vector<1xf32>
    %20 = vector.multi_reduction <add>, %19, %cst_8 [1] : vector<1x128xf32> to vector<1xf32>
    %21 = vector.shape_cast %20 : vector<1xf32> to vector<1x1xf32>
    %22 = tpu.reciprocal %21 {approx = true} : vector<1x1xf32> -> vector<1x1xf32>
    %cst_9 = arith.constant 5.000000e-01 : f32
    %23 = vector.broadcast %cst_9 : f32 to vector<1x1xf32>
    %24 = arith.mulf %22, %23 : vector<1x1xf32>
    %25 = vector.broadcast %19 : vector<1x128xf32> to vector<4x128xf32>
    %26 = arith.mulf %25, %14 : vector<4x128xf32>
    %cst_10 = arith.constant dense<0.000000e+00> : vector<4xf32>
    %27 = vector.multi_reduction <add>, %26, %cst_10 [1] : vector<4x128xf32> to vector<4xf32>
    %28 = vector.shape_cast %27 : vector<4xf32> to vector<4x1xf32>
    %29 = vector.extract_strided_slice %28 {offsets = [0, 0], sizes = [2, 1], strides = [1, 1]} : vector<4x1xf32> to vector<2x1xf32>
    %30 = vector.extract_strided_slice %28 {offsets = [2, 0], sizes = [2, 1], strides = [1, 1]} : vector<4x1xf32> to vector<2x1xf32>
    %cst_11 = arith.constant 5.000000e-01 : f32
    %31 = vector.broadcast %cst_11 : f32 to vector<2x1xf32>
    %32 = arith.mulf %30, %31 : vector<2x1xf32>
    %33 = arith.subf %29, %32 : vector<2x1xf32>
    %34 = arith.addf %29, %32 : vector<2x1xf32>
    %35 = tpu.concatenate %33, %34 in 0 : vector<2x1xf32>, vector<2x1xf32> -> vector<4x1xf32>
    %36 = vector.broadcast %24 : vector<1x1xf32> to vector<4x1xf32>
    %37 = arith.mulf %35, %36 : vector<4x1xf32>
    %c0_12 = arith.constant 0 : index
    %c0_13 = arith.constant 0 : index
    %c0_14 = arith.constant 0 : index
    %38 = vector.load %arg4[%c0_12, %c0_13, %c0_14] : memref<2x4x1xf32, #tpu.memory_space<vmem>>, vector<1x4x1xf32>
    %39 = vector.shape_cast %38 : vector<1x4x1xf32> to vector<4x1xf32>
    %40 = vector.shape_cast %37 : vector<4x1xf32> to vector<1x4x1xf32>
    tpu.vector_store %arg4[%c0_12, %c0_13, %c0_14], %40 {strides = array<i32>} : memref<2x4x1xf32, #tpu.memory_space<vmem>>, vector<1x4x1xf32>,
    %41 = vector.extract_strided_slice %12 {offsets = [0, 128], sizes = [1, 128], strides = [1, 1]} : vector<1x256xf32> to vector<1x128xf32>
    %42 = vector.extract_strided_slice %7 {offsets = [0, 128], sizes = [4, 128], strides = [1, 1]} : vector<4x256xf32> to vector<4x128xf32>
    %cst_15 = arith.constant dense<0xFF800000> : vector<1xf32>
    %43 = vector.multi_reduction <maximumf>, %41, %cst_15 [1] : vector<1x128xf32> to vector<1xf32>
    %44 = vector.shape_cast %43 : vector<1xf32> to vector<1x1xf32>
    %45 = vector.broadcast %44 : vector<1x1xf32> to vector<1x128xf32>
    %46 = arith.subf %41, %45 : vector<1x128xf32>
    %47 = math.exp %46 : vector<1x128xf32>
    %cst_16 = arith.constant dense<0.000000e+00> : vector<1xf32>
    %48 = vector.multi_reduction <add>, %47, %cst_16 [1] : vector<1x128xf32> to vector<1xf32>
    %49 = vector.shape_cast %48 : vector<1xf32> to vector<1x1xf32>
    %50 = tpu.reciprocal %49 {approx = true} : vector<1x1xf32> -> vector<1x1xf32>
    %cst_17 = arith.constant 5.000000e-01 : f32
    %51 = vector.broadcast %cst_17 : f32 to vector<1x1xf32>
    %52 = arith.mulf %50, %51 : vector<1x1xf32>
    %53 = vector.broadcast %47 : vector<1x128xf32> to vector<4x128xf32>
    %54 = arith.mulf %53, %42 : vector<4x128xf32>
    %cst_18 = arith.constant dense<0.000000e+00> : vector<4xf32>
    %55 = vector.multi_reduction <add>, %54, %cst_18 [1] : vector<4x128xf32> to vector<4xf32>
    %56 = vector.shape_cast %55 : vector<4xf32> to vector<4x1xf32>
    %57 = vector.extract_strided_slice %56 {offsets = [0, 0], sizes = [2, 1], strides = [1, 1]} : vector<4x1xf32> to vector<2x1xf32>
    %58 = vector.extract_strided_slice %56 {offsets = [2, 0], sizes = [2, 1], strides = [1, 1]} : vector<4x1xf32> to vector<2x1xf32>
    %cst_19 = arith.constant 5.000000e-01 : f32
    %59 = vector.broadcast %cst_19 : f32 to vector<2x1xf32>
    %60 = arith.mulf %58, %59 : vector<2x1xf32>
    %61 = arith.subf %57, %60 : vector<2x1xf32>
    %62 = arith.addf %57, %60 : vector<2x1xf32>
    %63 = tpu.concatenate %61, %62 in 0 : vector<2x1xf32>, vector<2x1xf32> -> vector<4x1xf32>
    %64 = vector.broadcast %52 : vector<1x1xf32> to vector<4x1xf32>
    %65 = arith.mulf %63, %64 : vector<4x1xf32>
    %c1 = arith.constant 1 : index
    %c0_20 = arith.constant 0 : index
    %c0_21 = arith.constant 0 : index
    %66 = vector.load %arg4[%c1, %c0_20, %c0_21] : memref<2x4x1xf32, #tpu.memory_space<vmem>>, vector<1x4x1xf32>
    %67 = vector.shape_cast %66 : vector<1x4x1xf32> to vector<4x1xf32>
    %68 = vector.shape_cast %65 : vector<4x1xf32> to vector<1x4x1xf32>
    tpu.vector_store %arg4[%c1, %c0_20, %c0_21], %68 {strides = array<i32>} : memref<2x4x1xf32, #tpu.memory_space<vmem>>, vector<1x4x1xf32>,
    return
  }
  func.func @transform_0(%arg0: i32) -> (i32, i32, i32) {
    %c0_i32 = arith.constant 0 : i32
    %c0_i32_0 = arith.constant 0 : i32
    %c0_i32_1 = arith.constant 0 : i32
    return %arg0, %c0_i32, %c0_i32_0 : i32, i32, i32
  }
  func.func @transform_1(%arg0: i32) -> (i32, i32) {
    %c0_i32 = arith.constant 0 : i32
    %c0_i32_0 = arith.constant 0 : i32
    %c0_i32_1 = arith.constant 0 : i32
    return %c0_i32, %c0_i32_0 : i32, i32
  }
  func.func @transform_2(%arg0: i32) -> (i32, i32) {
    %c0_i32 = arith.constant 0 : i32
    %c0_i32_0 = arith.constant 0 : i32
    %c0_i32_1 = arith.constant 0 : i32
    return %c0_i32, %c0_i32_0 : i32, i32
  }
  func.func @transform_3(%arg0: i32) -> (i32, i32, i32) {
    %c0_i32 = arith.constant 0 : i32
    %c0_i32_0 = arith.constant 0 : i32
    %c0_i32_1 = arith.constant 0 : i32
    return %arg0, %c0_i32, %c0_i32_0 : i32, i32, i32
  }
}

</mosaic_0001>

<llo_original>
// kernel: tpu_custom_call.1
$region0: #{tpu_custom_call.1}
  #allocation0 [shape = 'u32[]', space=smem, size = 0x4, offset = 0x4, fixed_abs, tag = 'smem constant byte address 0x4 - core index']
  #allocation1 [shape = 'u32[144,128]{1,0:T(1,128)}', space=vmem, size = 0x12000, scoped, tag = 'internal scratch']
  %s0 = inlined_call_operand.hbm [shape: bf16[1,48,256], index: 0, kind: input, shape index: {}]
  %s1 = inlined_call_operand.vmem [shape: bf16[8,48], index: 1, kind: input, shape index: {}]
  %s2 = inlined_call_operand.vmem [shape: f32[8,1], index: 2, kind: input, shape index: {}]
  %s3 = inlined_call_operand.vmem [shape: f32[2,4,1], index: 3, kind: output, shape index: {}]
  %s4 = sld [smem:[#allocation0]]
  $region26: #{tpu_custom_call.1} parent=0
    _
  %s6 = ssub.s32 1, %s4
  %s7 = scalar_select 0, %s6, %s4
  $region1: #{tpu_custom_call.1} parent=0
    #allocation2 [shape = 'u8[24576]{0}', space=vmem, size = 0x6000, scoped, tag = 'input window, operand 0, single buffered']
    #allocation3 [shape = 's32[1]{0}', space=sflag, size = 0x4, scoped, tag = 'scoped memory for tpu_custom_call.1']
    %8 = vsyncpa [#allocation3], 0
    // Predicated region
    $region2: #{tpu_custom_call.1} parent=1 // pred_check
      _
    $region3: #{tpu_custom_call.1} parent=1 // pred_check_branch
      %10 = sbr.rel (0) target = $region5
    $region4: #{tpu_custom_call.1} parent=1 // pred_region
      %s12 = ssub.s32 768, 768
      %13 = vsyncadd [#allocation3], %s12
      %s14 = sshll.u32 [#allocation2], 4
      %s15 = int_to_ptr.vmem [resolvable:$true] %s14
      %20 = dma.hbm_to_vmem [thread:$0]  %s0, 768, %s15, [#allocation3], 128, 128, 8
    $region5: #{tpu_custom_call.1} parent=1 // pred_fallthru
      _
    // Predicated region
    $region6: #{tpu_custom_call.1} parent=1 // pred_check
      _
    $region7: #{tpu_custom_call.1} parent=1 // pred_check_branch
      %22 = sbr.rel (0) target = $region9
    $region8: #{tpu_custom_call.1} parent=1 // pred_region
      _
    $region9: #{tpu_custom_call.1} parent=1 // pred_fallthru
      _
    // Predicated region
    $region10: #{tpu_custom_call.1} parent=1 // pred_check
      _
    $region11: #{tpu_custom_call.1} parent=1 // pred_check_branch
      %24 = sbr.rel (0) target = $region13
    $region12: #{tpu_custom_call.1} parent=1 // pred_region
      _
    $region13: #{tpu_custom_call.1} parent=1 // pred_fallthru
      _
    // Predicated region
    $region14: #{tpu_custom_call.1} parent=1 // pred_check
      _
    $region15: #{tpu_custom_call.1} parent=1 // pred_check_branch
      %26 = sbr.rel (0) target = $region17
    $region16: #{tpu_custom_call.1} parent=1 // pred_region
      %27 = dma.done [#allocation3], 768
    $region17: #{tpu_custom_call.1} parent=1 // pred_fallthru
      _
    %v29 = vld [vmem:[%s1] sm:$0xf]
    %v30 = vld [vmem:[%s2] sm:$0xff]
    %v31 = vld [vmem:[#allocation2] sm:$0xff]
    %v32 = vld [vmem:[#allocation2 + $0x8] sm:$0xff]
    %v33 = vld [vmem:[#allocation2 + $0x10] sm:$0xff]
    %v34 = vld [vmem:[#allocation2 + $0x18] sm:$0xff]
    %v35 = vld [vmem:[#allocation2 + $0x20] sm:$0xff]
    %v36 = vld [vmem:[#allocation2 + $0x28] sm:$0xff]
    %38 = vset.pattern.permute.xlu0 0
    %39 = vperm.xlu0 %38, %v30
    %v40 = vpop.permute.xlu0 %39
    %v48 = vunpack.c.l.b16 %v31
    %v49 = vunpack.c.h.b16 %v31
    %v50 = vunpack.c.l.b16 %v32
    %v51 = vunpack.c.h.b16 %v32
    %v52 = vunpack.c.l.b16 %v33
    %v53 = vunpack.c.h.b16 %v33
    %v54 = vunpack.c.l.b16 %v34
    %v55 = vunpack.c.h.b16 %v34
    %v56 = vunpack.c.l.b16 %v35
    %v57 = vunpack.c.h.b16 %v35
    %v58 = vunpack.c.l.b16 %v36
    %v59 = vunpack.c.h.b16 %v36
    %v60 = vpack.c.b16 %v50, %v48
    %v61 = vpack.c.b16 %v51, %v49
    %v62 = vpack.c.b16 %v54, %v52
    %v63 = vpack.c.b16 %v55, %v53
    %v64 = vpack.c.b16 %v58, %v56
    %v65 = vpack.c.b16 %v59, %v57
    %vm72 = vcmask 392192
    %v74 = vsel %vm72, %v29, 0
    %76 = vmatprep.subr.bf16.mxu0 %v61
    %77 = vmatpush1.bf16.msra.mxu0 %v60
    %78 = vmatprep.subr.bf16.mxu0 %v63
    %79 = vmatpush1.bf16.msra.mxu0 %v62
    %80 = vmatprep.subr.bf16.mxu0 %v65
    %81 = vmatpush1.bf16.msra.mxu0 %v64
    %82 = vmatprep.subr.bf16.mxu0 0
    %83 = vmatpush1.bf16.msra.mxu0 0
    %84 = vmatprep.subr.bf16.mxu0 0
    %85 = vmatpush1.bf16.msra.mxu0 0
    %86 = vmatprep.subr.bf16.mxu0 0
    %87 = vmatpush1.bf16.msra.mxu0 0
    %88 = vmatprep.subr.bf16.mxu0 0
    %89 = vmatpush1.bf16.msra.mxu0 0
    %90 = vmatprep.subr.bf16.mxu0 0
    %91 = vmatpush1.bf16.msra.mxu0 0
    %92 = vmatprep.subr.bf16.mxu0 0
    %93 = vmatpush1.bf16.msra.mxu0 0
    %94 = vmatprep.subr.bf16.mxu0 0
    %95 = vmatpush1.bf16.msra.mxu0 0
    %96 = vmatprep.subr.bf16.mxu0 0
    %97 = vmatpush1.bf16.msra.mxu0 0
    %98 = vmatprep.subr.bf16.mxu0 0
    %99 = vmatpush1.bf16.msra.mxu0 0
    %100 = vmatprep.subr.bf16.mxu0 0
    %101 = vmatpush1.bf16.msra.mxu0 0
    %102 = vmatprep.subr.bf16.mxu0 0
    %103 = vmatpush1.bf16.msra.mxu0 0
    %104 = vmatprep.subr.bf16.mxu0 0
    %105 = vmatpush1.bf16.msra.mxu0 0
    %106 = vmatprep.subr.bf16.mxu0 0
    %107 = vmatpush1.bf16.msra.mxu0 0
    %108 = vmatprep.mubr.bf16.mxu0 0
    %109 = vmatmul.mubr.bf16.gmra.mrb[0].mxu0 %v74
    %v110 = vpop.f32.mrb[0].mxu0
    %v111 = vadd.f32 %v40, %v110
    %v112 = vpop.f32.mrb[0].mxu0
    %v113 = vadd.f32 %v40, %v112
    %v114 = vpop.f32.mrb[0].mxu0
    %v115 = vpop.f32.mrb[0].mxu0
    %116 = vdwg.mxu0
    %v119 = vrot.slane %v111, 1
    %v120 = vrot.slane %v113, 1
    %v123 = vmul.f32 %v111, %v119
    %v124 = vmul.f32 %v113, %v120
    %v125 = vmul.f32 %v123, 15.0
    %v126 = vmul.f32 %v124, 15.0
    %vm127 = vcmask 1044484
    %v128 = vsel %vm127, %v125, -inf
    %129 = vmax.xlane.f32.xlu0 %v128
    %v130 = vpop.xlane.xlu0 %129
    %v131 = vsub.f32 %v125, %v130
    %v132 = vmul.f32 %v131, 1.442695
    %v133 = vpow.pop %v132
    %v134 = vsel %vm127, %v133, 0.0
    %135 = vadd.xlane.f32.xlu0 %v134
    %v136 = vpop.xlane.xlu0 %135
    %v137 = vrcp.pop %v136
    %v138 = vmul.f32 %v137, 0.5
    %v139 = vlaneseq
    %v140 = vshrl.u32 %v139, 7
    %v141 = vsub.s32 4, %v140
    %v142 = vrot.slane %v133, %v141
    %v143 = vmul.f32 %v142, %v111
    %vm144 = vcmask 1043456
    %v145 = vsel %vm144, %v143, 0.0
    %146 = vadd.xlane.f32.xlu0 %v145
    %v147 = vpop.xlane.xlu0 %146
    %v148 = vmul.f32 %v147, 0.5
    %v150 = vrot.slane %v148, 2
    %v152 = vsub.f32 %v147, %v150
    %v153 = vadd.f32 %v147, %v150
    %v155 = vrot.slane %v153, 6
    %vm157 = vcmask 1041408
    %v158 = vsel %vm157, %v152, %v155
    %v159 = vlaneseq
    %v160 = vshrl.u32 %v159, 7
    %v161 = vsub.s32 4, %v160
    %v162 = vrot.slane %v138, %v161
    %v163 = vmul.f32 %v158, %v162
    %vm164 = vcmask 3072
    %165 = vst.msk [vmem:[%s3] sm:$0xf] %vm164, %v163
    %v166 = vsel %vm127, %v126, -inf
    %167 = vmax.xlane.f32.xlu0 %v166
    %v168 = vpop.xlane.xlu0 %167
    %v169 = vsub.f32 %v126, %v168
    %v170 = vmul.f32 %v169, 1.442695
    %v171 = vpow.pop %v170
    %v172 = vsel %vm127, %v171, 0.0
    %173 = vadd.xlane.f32.xlu0 %v172
    %v174 = vpop.xlane.xlu0 %173
    %v175 = vrcp.pop %v174
    %v176 = vmul.f32 %v175, 0.5
    %v177 = vlaneseq
    %v178 = vshrl.u32 %v177, 7
    %v179 = vsub.s32 4, %v178
    %v180 = vrot.slane %v171, %v179
    %v181 = vmul.f32 %v180, %v113
    %v182 = vsel %vm144, %v181, 0.0
    %183 = vadd.xlane.f32.xlu0 %v182
    %v184 = vpop.xlane.xlu0 %183
    %v185 = vmul.f32 %v184, 0.5
    %v187 = vrot.slane %v185, 2
    %v189 = vsub.f32 %v184, %v187
    %v190 = vadd.f32 %v184, %v187
    %v192 = vrot.slane %v190, 6
    %v194 = vsel %vm157, %v189, %v192
    %v195 = vlaneseq
    %v196 = vshrl.u32 %v195, 7
    %v197 = vsub.s32 4, %v196
    %v198 = vrot.slane %v176, %v197
    %v199 = vmul.f32 %v194, %v198
    %s200 = scalar_lea.vmem %s3, 4
    %201 = vst.msk [vmem:[%s200] sm:$0xf] %vm164, %v199
    // Predicated region
    $region18: #{tpu_custom_call.1} parent=1 // pred_check
      _
    $region19: #{tpu_custom_call.1} parent=1 // pred_check_branch
      %203 = sbr.rel (0) target = $region21
    $region20: #{tpu_custom_call.1} parent=1 // pred_region
      _
    $region21: #{tpu_custom_call.1} parent=1 // pred_fallthru
      _
    // Predicated region
    $region22: #{tpu_custom_call.1} parent=1 // pred_check
      _
    $region23: #{tpu_custom_call.1} parent=1 // pred_check_branch
      %205 = sbr.rel (0) target = $region25
    $region24: #{tpu_custom_call.1} parent=1 // pred_region
      _
    $region25: #{tpu_custom_call.1} parent=1 // pred_fallthru
      _
    %206 = vsyncpa [#allocation3], 1

</llo_original>
